<compile_context>
chip_gen: v7x
topology: tpu7x:2x2x1
jax: 0.10.0
libtpu: 0.0.40
codegen_flags: <defaults>
</compile_context>

<pallas_src>
import jax
import jax.numpy as jnp
import numpy as np
from jax.experimental import pallas as pl
from jax.experimental.pallas import tpu as pltpu


def _round_up(x, m):
    return (x + m - 1) // m * m


def mean_agg_kernel(w_ref, e_ref, o_ref, rsum_ref):
    k = pl.program_id(1)  # reduction (unique-node) axis, innermost

    @pl.when(k == 0)
    def _():
        o_ref[...] = jnp.zeros_like(o_ref)
        rsum_ref[...] = jnp.zeros_like(rsum_ref)

    w = w_ref[...]  # (tm, tk) f32 gate weights (un-normalized)
    # Accumulate the matmul straight into the VMEM-resident output tile.
    o_ref[...] += jnp.dot(w, e_ref[...], preferred_element_type=jnp.float32)
    rsum_ref[...] += jnp.sum(w, axis=1, keepdims=True)

    @pl.when(k == pl.num_programs(1) - 1)
    def _():
        rsum = rsum_ref[...]
        # Guard empty-neighbor rows (rsum == 0) -> emit 0 instead of NaN/Inf.
        inv = jnp.where(rsum > 0.0,
                        pl.reciprocal(rsum, approx=True),
                        jnp.zeros_like(rsum))
        o_ref[...] = o_ref[...] * inv


def mean_aggregate(weight_matrix, embed_matrix, *, tile_m=256, tile_k=2048):
    """weight_matrix: [B, U] float, embed_matrix: [U, D] float -> [B, D] f32.

    Computes (W / W.sum(1, keepdims=True)) @ E using the identity
    (W @ E) / rowsum so the K axis is reduced in a single streaming pass.
    """
    B, U = weight_matrix.shape
    U2, D = embed_matrix.shape
    assert U == U2

    w = weight_matrix.astype(jnp.float32)     # keep gate weights exact
    e = embed_matrix.astype(jnp.bfloat16)     # halve HBM bytes for E

    # Lane/sublane-dense, padded tiling.
    Dp = _round_up(D, 128)
    tm = min(tile_m, _round_up(B, 8))
    Bp = _round_up(B, tm)
    tk = min(tile_k, _round_up(U, 128))

    # Budget double-buffered W (f32) + E (bf16) + resident output tile (f32)
    # against ~40 MiB usable VMEM (safe on v7x's 64 MiB per-TC VMEM).
    def vmem_est(tk_):
        return (2 * tm * tk_ * 4       # W double buffer
                + 2 * tk_ * Dp * 2     # E double buffer (bf16)
                + 2 * tm * Dp * 4      # output tile (conservatively x2)
                + tm * 4)              # row-sum scratch
    while tk > 128 and vmem_est(tk) > 40 * 1024 * 1024:
        tk = _round_up(tk // 2, 128)
    Up = _round_up(U, tk)

    if Bp != B or Up != U:
        w = jnp.pad(w, ((0, Bp - B), (0, Up - U)))
    if Up != U or Dp != D:
        e = jnp.pad(e, ((0, Up - U), (0, Dp - D)))

    grid = (Bp // tm, Up // tk)
    out = pl.pallas_call(
        mean_agg_kernel,
        out_shape=jax.ShapeDtypeStruct((Bp, Dp), jnp.float32),
        grid_spec=pltpu.PrefetchScalarGridSpec(
            num_scalar_prefetch=0,
            grid=grid,
            in_specs=[
                pl.BlockSpec((tm, tk), lambda i, k: (i, k)),   # W tile
                pl.BlockSpec((tk, Dp), lambda i, k: (k, 0)),   # E tile (bf16)
            ],
            out_specs=pl.BlockSpec((tm, Dp), lambda i, k: (i, 0)),
            scratch_shapes=[
                pltpu.VMEM((tm, 1), jnp.float32),  # row-sum accumulator
            ],
        ),
        compiler_params=pltpu.CompilerParams(
            dimension_semantics=("parallel", "arbitrary"),
            vmem_limit_bytes=48 * 1024 * 1024,
        ),
    )(w, e)
    return out[:B, :D]


def build_synthetic_inputs(key, batch=8, num_unique=256, feat_dim=128,
                           num_sample=10):
    """Deterministically emulate the Python-side sampler / feature lookup.

    Stands in for `self.sampler(nodes, num_sample)` plus the set-union /
    index-dict bookkeeping of the original module (pure Python, not kernel
    work): each batch node gets `num_sample` sampled neighbors among the
    unique nodes with soft-gate weights (is_softgate=True path).
    """
    k1, k2, k3 = jax.random.split(key, 3)
    neigh_idx = jax.random.randint(k1, (batch, num_sample), 0, num_unique)
    gate = jax.random.uniform(k2, (batch, num_sample), minval=0.1, maxval=1.0)

    # Scatter gate weights into the dense (batch x num_unique) weight matrix,
    # mirroring `weight_matrix[row_indices, column_indices] = gate_weight`.
    weight_matrix = jnp.zeros((batch, num_unique), jnp.float32)
    rows = jnp.repeat(jnp.arange(batch), num_sample)
    weight_matrix = weight_matrix.at[rows, neigh_idx.reshape(-1)].set(
        gate.reshape(-1))

    # `self.features(unique_nodes_list)` -> dense embedding table lookup.
    embed_matrix = jax.random.normal(k3, (num_unique, feat_dim), jnp.float32)
    return weight_matrix, embed_matrix


if __name__ == "__main__":
    key = jax.random.PRNGKey(0)
    # TODO(synk): the Python-side neighbor sampling / set-union / dict
    # bookkeeping of the original module has no Pallas equivalent; it is
    # emulated deterministically above and only the dense math is in-kernel.
    # TODO(synk): a gather-based formulation (scalar-prefetched neighbor ids,
    # fetch only the ~B*num_sample needed E rows) would cut HBM traffic
    # further when U >> B*num_sample; the dense W@E path is kept here to
    # mirror the module's weight_matrix.mm(embed_matrix) exactly.
    W, E = build_synthetic_inputs(key, batch=8, num_unique=256, feat_dim=128,
                                  num_sample=10)

    out = jax.block_until_ready(mean_aggregate(W, E))

    # Reference: the PyTorch forward's dense math (numpy f32, with E rounded
    # to bf16 to match what the kernel streams from HBM).
    Wn = np.asarray(W, dtype=np.float32)
    En = np.asarray(E.astype(jnp.bfloat16).astype(jnp.float32))
    rowsum = Wn.sum(axis=1, keepdims=True)
    safe = np.where(rowsum > 0.0, rowsum, 1.0)
    ref = np.where(rowsum > 0.0, (Wn / safe) @ En, 0.0)

    assert out.shape == ref.shape == (8, 128)
    np.testing.assert_allclose(np.asarray(out), ref, atol=1e-2, rtol=1e-2)

    print("KERNEL_OK")
</pallas_src>

<mosaic_0001>
module attributes {stable_mosaic.version = 11 : i64} {
  func.func @mean_agg_kernel(%arg0: i32, %arg1: i32, %arg2: memref<8x256xf32, #tpu.memory_space<vmem>>, %arg3: memref<256x128xbf16, #tpu.memory_space<vmem>>, %arg4: memref<8x128xf32, #tpu.memory_space<vmem>>, %arg5: memref<8x1xf32, #tpu.memory_space<vmem>>) attributes {dimension_semantics = [#tpu.dimension_semantics<parallel>, #tpu.dimension_semantics<arbitrary>], iteration_bounds = array<i64: 1, 1>, scalar_prefetch = 0 : i64, scratch_operands = 1 : i64, tpu.core_type = #tpu.core_type<tc>, window_params = [{transform_indices = @transform_0, window_bounds = array<i64: 8, 256>}, {transform_indices = @transform_1, window_bounds = array<i64: 256, 128>}, {transform_indices = @transform_2, window_bounds = array<i64: 8, 128>}]} {
    %c0_i32 = arith.constant 0 : i32
    %0 = arith.cmpi eq, %arg1, %c0_i32 : i32
    %1 = arith.extui %0 : i1 to i32
    %c0_i32_0 = arith.constant 0 : i32
    %2 = arith.cmpi ne, %1, %c0_i32_0 : i32
    scf.if %2 {
      %cst_15 = arith.constant 0.000000e+00 : f32
      %17 = vector.broadcast %cst_15 : f32 to vector<8x128xf32>
      %c0_16 = arith.constant 0 : index
      %c0_17 = arith.constant 0 : index
      %18 = vector.load %arg4[%c0_16, %c0_17] : memref<8x128xf32, #tpu.memory_space<vmem>>, vector<8x128xf32>
      tpu.vector_store %arg4[%c0_16, %c0_17], %17 {strides = array<i32>} : memref<8x128xf32, #tpu.memory_space<vmem>>, vector<8x128xf32>,
      %cst_18 = arith.constant 0.000000e+00 : f32
      %19 = vector.broadcast %cst_18 : f32 to vector<8x1xf32>
      %c0_19 = arith.constant 0 : index
      %c0_20 = arith.constant 0 : index
      %20 = vector.load %arg5[%c0_19, %c0_20] : memref<8x1xf32, #tpu.memory_space<vmem>>, vector<8x1xf32>
      tpu.vector_store %arg5[%c0_19, %c0_20], %19 {strides = array<i32>} : memref<8x1xf32, #tpu.memory_space<vmem>>, vector<8x1xf32>,
    } else {
    }
    %c0 = arith.constant 0 : index
    %c0_1 = arith.constant 0 : index
    %3 = vector.load %arg2[%c0, %c0_1] : memref<8x256xf32, #tpu.memory_space<vmem>>, vector<8x256xf32>
    %c0_2 = arith.constant 0 : index
    %c0_3 = arith.constant 0 : index
    %4 = vector.load %arg4[%c0_2, %c0_3] : memref<8x128xf32, #tpu.memory_space<vmem>>, vector<8x128xf32>
    %c0_4 = arith.constant 0 : index
    %c0_5 = arith.constant 0 : index
    %5 = vector.load %arg3[%c0_4, %c0_5] : memref<256x128xbf16, #tpu.memory_space<vmem>>, vector<256x128xbf16>
    %cst = arith.constant dense<0.000000e+00> : vector<8x128xf32>
    %6 = tpu.matmul %3, %5, %cst {dimension_numbers = #tpu.dot_dimension_numbers<[1], [0], [0], [1], [0, 0, 1, 1], [], []>} : vector<8x256xf32>, vector<256x128xbf16>, vector<8x128xf32> -> vector<8x128xf32>
    %7 = arith.addf %4, %6 : vector<8x128xf32>
    %c0_6 = arith.constant 0 : index
    %c0_7 = arith.constant 0 : index
    %8 = vector.load %arg4[%c0_6, %c0_7] : memref<8x128xf32, #tpu.memory_space<vmem>>, vector<8x128xf32>
    tpu.vector_store %arg4[%c0_6, %c0_7], %7 {strides = array<i32>} : memref<8x128xf32, #tpu.memory_space<vmem>>, vector<8x128xf32>,
    %c0_8 = arith.constant 0 : index
    %c0_9 = arith.constant 0 : index
    %9 = vector.load %arg5[%c0_8, %c0_9] : memref<8x1xf32, #tpu.memory_space<vmem>>, vector<8x1xf32>
    %cst_10 = arith.constant dense<0.000000e+00> : vector<8xf32>
    %10 = vector.multi_reduction <add>, %3, %cst_10 [1] : vector<8x256xf32> to vector<8xf32>
    %11 = vector.shape_cast %10 : vector<8xf32> to vector<8x1xf32>
    %12 = arith.addf %9, %11 : vector<8x1xf32>
    %c0_11 = arith.constant 0 : index
    %c0_12 = arith.constant 0 : index
    %13 = vector.load %arg5[%c0_11, %c0_12] : memref<8x1xf32, #tpu.memory_space<vmem>>, vector<8x1xf32>
    tpu.vector_store %arg5[%c0_11, %c0_12], %12 {strides = array<i32>} : memref<8x1xf32, #tpu.memory_space<vmem>>, vector<8x1xf32>,
    %c0_i32_13 = arith.constant 0 : i32
    %14 = arith.cmpi eq, %arg1, %c0_i32_13 : i32
    %15 = arith.extui %14 : i1 to i32
    %c0_i32_14 = arith.constant 0 : i32
    %16 = arith.cmpi ne, %15, %c0_i32_14 : i32
    scf.if %16 {
      %c0_15 = arith.constant 0 : index
      %c0_16 = arith.constant 0 : index
      %17 = vector.load %arg5[%c0_15, %c0_16] : memref<8x1xf32, #tpu.memory_space<vmem>>, vector<8x1xf32>
      %cst_17 = arith.constant 0.000000e+00 : f32
      %18 = vector.broadcast %cst_17 : f32 to vector<8x1xf32>
      %19 = arith.cmpf ogt, %17, %18 : vector<8x1xf32>
      %20 = tpu.reciprocal %17 {approx = true} : vector<8x1xf32> -> vector<8x1xf32>
      %cst_18 = arith.constant 0.000000e+00 : f32
      %21 = vector.broadcast %cst_18 : f32 to vector<8x1xf32>
      %22 = arith.select %19, %20, %21 : vector<8x1xi1>, vector<8x1xf32>
      %c0_19 = arith.constant 0 : index
      %c0_20 = arith.constant 0 : index
      %23 = vector.load %arg4[%c0_19, %c0_20] : memref<8x128xf32, #tpu.memory_space<vmem>>, vector<8x128xf32>
      %24 = vector.broadcast %22 : vector<8x1xf32> to vector<8x128xf32>
      %25 = arith.mulf %23, %24 : vector<8x128xf32>
      %c0_21 = arith.constant 0 : index
      %c0_22 = arith.constant 0 : index
      %26 = vector.load %arg4[%c0_21, %c0_22] : memref<8x128xf32, #tpu.memory_space<vmem>>, vector<8x128xf32>
      tpu.vector_store %arg4[%c0_21, %c0_22], %25 {strides = array<i32>} : memref<8x128xf32, #tpu.memory_space<vmem>>, vector<8x128xf32>,
    } else {
    }
    return
  }
  func.func @transform_0(%arg0: i32, %arg1: i32) -> (i32, i32) {
    %c0_i32 = arith.constant 0 : i32
    return %arg0, %arg1 : i32, i32
  }
  func.func @transform_1(%arg0: i32, %arg1: i32) -> (i32, i32) {
    %c0_i32 = arith.constant 0 : i32
    %c0_i32_0 = arith.constant 0 : i32
    return %arg1, %c0_i32 : i32, i32
  }
  func.func @transform_2(%arg0: i32, %arg1: i32) -> (i32, i32) {
    %c0_i32 = arith.constant 0 : i32
    %c0_i32_0 = arith.constant 0 : i32
    return %arg0, %c0_i32 : i32, i32
  }
}

</mosaic_0001>

<llo_original>
// kernel: tpu_custom_call.1
$region0: #{tpu_custom_call.1}
  #allocation0 [shape = 'u32[]', space=smem, size = 0x4, offset = 0x4, fixed_abs, tag = 'smem constant byte address 0x4 - core index']
  #allocation1 [shape = 'u32[144,128]{1,0:T(1,128)}', space=vmem, size = 0x12000, scoped, tag = 'internal scratch']
  #allocation2 [shape = 'f32[8,1]{1,0:T(8,128)}', space=vmem, size = 0x1000, scoped, tag = 'scratch operand']
  %s0 = inlined_call_operand.hbm [shape: f32[8,256], index: 0, kind: input, shape index: {}]
  %s1 = inlined_call_operand.hbm [shape: bf16[256,128], index: 1, kind: input, shape index: {}]
  %s2 = inlined_call_operand.hbm [shape: f32[8,128], index: 2, kind: output, shape index: {}]
  %s3 = sld [smem:[#allocation0]]
  $region34: #{tpu_custom_call.1} parent=0
    _
  %s5 = ssub.s32 1, %s3
  %s6 = scalar_select 0, %s5, %s3
  $region1: #{tpu_custom_call.1} parent=0
    #allocation3 [shape = 'u8[8192]{0}', space=vmem, size = 0x2000, scoped, tag = 'input window, operand 0, single buffered']
    #allocation4 [shape = 's32[1]{0}', space=sflag, size = 0x4, scoped, tag = 'scoped memory for tpu_custom_call.1']
    #allocation5 [shape = 's32[1]{0}', space=sflag, size = 0x4, scoped, tag = 'scoped memory for tpu_custom_call.1']
    #allocation6 [shape = 'u8[65536]{0}', space=vmem, size = 0x10000, scoped, tag = 'input window, operand 1, single buffered']
    #allocation7 [shape = 's32[1]{0}', space=sflag, size = 0x4, scoped, tag = 'scoped memory for tpu_custom_call.1']
    #allocation8 [shape = 'u8[4096]{0}', space=vmem, size = 0x1000, scoped, tag = 'output window, operand 0, single buffered']
    %7 = vsyncpa [#allocation4], 0
    %8 = vsyncpa [#allocation7], 0
    %9 = vsyncpa [#allocation5], 0
    // Predicated region
    $region2: #{tpu_custom_call.1} parent=1 // pred_check
      _
    $region3: #{tpu_custom_call.1} parent=1 // pred_check_branch
      %11 = sbr.rel (0) target = $region5
    $region4: #{tpu_custom_call.1} parent=1 // pred_region
      %s13 = ssub.s32 256, 256
      %14 = vsyncadd [#allocation4], %s13
      %s16 = sshll.u32 [#allocation3], 4
      %s17 = int_to_ptr.vmem [resolvable:$true] %s16
      %19 = dma.hbm_to_vmem [thread:$0]  %s0, 256, %s17, [#allocation4]
    $region5: #{tpu_custom_call.1} parent=1 // pred_fallthru
      _
    // Predicated region
    $region6: #{tpu_custom_call.1} parent=1 // pred_check
      _
    $region7: #{tpu_custom_call.1} parent=1 // pred_check_branch
      %21 = sbr.rel (0) target = $region9
    $region8: #{tpu_custom_call.1} parent=1 // pred_region
      %s23 = ssub.s32 2048, 2048
      %24 = vsyncadd [#allocation7], %s23
      %s25 = sshll.u32 [#allocation6], 4
      %s26 = int_to_ptr.vmem [resolvable:$true] %s25
      %31 = dma.hbm_to_vmem [thread:$0]  %s1, 2048, %s26, [#allocation7], 64, 64, 4
    $region9: #{tpu_custom_call.1} parent=1 // pred_fallthru
      _
    // Predicated region
    $region10: #{tpu_custom_call.1} parent=1 // pred_check
      _
    $region11: #{tpu_custom_call.1} parent=1 // pred_check_branch
      %33 = sbr.rel (0) target = $region13
    $region12: #{tpu_custom_call.1} parent=1 // pred_region
      %34 = dma.done [#allocation4], 256
    $region13: #{tpu_custom_call.1} parent=1 // pred_fallthru
      _
    // Predicated region
    $region14: #{tpu_custom_call.1} parent=1 // pred_check
      _
    $region15: #{tpu_custom_call.1} parent=1 // pred_check_branch
      %36 = sbr.rel (0) target = $region17
    $region16: #{tpu_custom_call.1} parent=1 // pred_region
      %37 = dma.done [#allocation7], 2048
    $region17: #{tpu_custom_call.1} parent=1 // pred_fallthru
      _
    %p39 = scmp.eq.s32.totalorder 0, 0
    // Predicated region
    $region18: #{tpu_custom_call.1} parent=1 // pred_check
      %p40 = pneg %p39
    $region19: #{tpu_custom_call.1} parent=1 // pred_check_branch
      %42 = sbr.rel (%p40) target = $region21
    $region20: #{tpu_custom_call.1} parent=1 // pred_region
      %43 = vst [vmem:[#allocation8] sm:$0xff] 0.0
      %vm44 = vcmask 7168
      %45 = vst.msk [vmem:[#allocation2] sm:$0xff] %vm44, 0.0
    $region21: #{tpu_custom_call.1} parent=1 // pred_fallthru
      _
    %v46 = vld [vmem:[#allocation3] sm:$0xff]
    %v47 = vld [vmem:[#allocation3 + $0x8] sm:$0xff]
    %v48 = vld [vmem:[#allocation8] sm:$0xff]
    %v49 = vld [vmem:[#allocation6] sm:$0xf]
    %v50 = vld [vmem:[#allocation6 + $0x4] sm:$0xf]
    %v51 = vld [vmem:[#allocation6 + $0x8] sm:$0xf]
    %v52 = vld [vmem:[#allocation6 + $0xc] sm:$0xf]
    %v53 = vld [vmem:[#allocation6 + $0x10] sm:$0xf]
    %v54 = vld [vmem:[#allocation6 + $0x14] sm:$0xf]
    %v55 = vld [vmem:[#allocation6 + $0x18] sm:$0xf]
    %v56 = vld [vmem:[#allocation6 + $0x1c] sm:$0xf]
    %v57 = vld [vmem:[#allocation6 + $0x20] sm:$0xf]
    %v58 = vld [vmem:[#allocation6 + $0x24] sm:$0xf]
    %v59 = vld [vmem:[#allocation6 + $0x28] sm:$0xf]
    %v60 = vld [vmem:[#allocation6 + $0x2c] sm:$0xf]
    %v61 = vld [vmem:[#allocation6 + $0x30] sm:$0xf]
    %v62 = vld [vmem:[#allocation6 + $0x34] sm:$0xf]
    %v63 = vld [vmem:[#allocation6 + $0x38] sm:$0xf]
    %v64 = vld [vmem:[#allocation6 + $0x3c] sm:$0xf]
    %v65 = vld [vmem:[#allocation6 + $0x40] sm:$0xf]
    %v66 = vld [vmem:[#allocation6 + $0x44] sm:$0xf]
    %v67 = vld [vmem:[#allocation6 + $0x48] sm:$0xf]
    %v68 = vld [vmem:[#allocation6 + $0x4c] sm:$0xf]
    %v69 = vld [vmem:[#allocation6 + $0x50] sm:$0xf]
    %v70 = vld [vmem:[#allocation6 + $0x54] sm:$0xf]
    %v71 = vld [vmem:[#allocation6 + $0x58] sm:$0xf]
    %v72 = vld [vmem:[#allocation6 + $0x5c] sm:$0xf]
    %v73 = vld [vmem:[#allocation6 + $0x60] sm:$0xf]
    %v74 = vld [vmem:[#allocation6 + $0x64] sm:$0xf]
    %v75 = vld [vmem:[#allocation6 + $0x68] sm:$0xf]
    %v76 = vld [vmem:[#allocation6 + $0x6c] sm:$0xf]
    %v77 = vld [vmem:[#allocation6 + $0x70] sm:$0xf]
    %v78 = vld [vmem:[#allocation6 + $0x74] sm:$0xf]
    %v79 = vld [vmem:[#allocation6 + $0x78] sm:$0xf]
    %v80 = vld [vmem:[#allocation6 + $0x7c] sm:$0xf]
    %v113 = vunpack.c.l.b16 %v49
    %v114 = vunpack.c.l.b16 %v50
    %v115 = vunpack.c.l.b16 %v51
    %v116 = vunpack.c.l.b16 %v52
    %v117 = vunpack.c.l.b16 %v53
    %v118 = vunpack.c.l.b16 %v54
    %v119 = vunpack.c.l.b16 %v55
    %v120 = vunpack.c.l.b16 %v56
    %v121 = vunpack.c.l.b16 %v57
    %v122 = vunpack.c.l.b16 %v58
    %v123 = vunpack.c.l.b16 %v59
    %v124 = vunpack.c.l.b16 %v60
    %v125 = vunpack.c.l.b16 %v61
    %v126 = vunpack.c.l.b16 %v62
    %v127 = vunpack.c.l.b16 %v63
    %v128 = vunpack.c.l.b16 %v64
    %v129 = vunpack.c.l.b16 %v65
    %v130 = vunpack.c.l.b16 %v66
    %v131 = vunpack.c.l.b16 %v67
    %v132 = vunpack.c.l.b16 %v68
    %v133 = vunpack.c.l.b16 %v69
    %v134 = vunpack.c.l.b16 %v70
    %v135 = vunpack.c.l.b16 %v71
    %v136 = vunpack.c.l.b16 %v72
    %v137 = vunpack.c.l.b16 %v73
    %v138 = vunpack.c.l.b16 %v74
    %v139 = vunpack.c.l.b16 %v75
    %v140 = vunpack.c.l.b16 %v76
    %v141 = vunpack.c.l.b16 %v77
    %v142 = vunpack.c.l.b16 %v78
    %v143 = vunpack.c.l.b16 %v79
    %v144 = vunpack.c.l.b16 %v80
    %v145 = vpack.c.b16 %v114, %v113
    %v146 = vpack.c.b16 %v116, %v115
    %v147 = vpack.c.b16 %v118, %v117
    %v148 = vpack.c.b16 %v120, %v119
    %v149 = vpack.c.b16 %v122, %v121
    %v150 = vpack.c.b16 %v124, %v123
    %v151 = vpack.c.b16 %v126, %v125
    %v152 = vpack.c.b16 %v128, %v127
    %v153 = vpack.c.b16 %v130, %v129
    %v154 = vpack.c.b16 %v132, %v131
    %v155 = vpack.c.b16 %v134, %v133
    %v156 = vpack.c.b16 %v136, %v135
    %v157 = vpack.c.b16 %v138, %v137
    %v158 = vpack.c.b16 %v140, %v139
    %v159 = vpack.c.b16 %v142, %v141
    %v160 = vpack.c.b16 %v144, %v143
    %177 = vmatprep.subr.bf16.mxu0 0
    %178 = vmatpush1.bf16.msra.mxu0 %v145
    %179 = vmatprep.subr.bf16.mxu0 0
    %180 = vmatpush1.bf16.msra.mxu0 %v146
    %181 = vmatprep.subr.bf16.mxu0 0
    %182 = vmatpush1.bf16.msra.mxu0 %v147
    %183 = vmatprep.subr.bf16.mxu0 0
    %184 = vmatpush1.bf16.msra.mxu0 %v148
    %185 = vmatprep.subr.bf16.mxu0 0
    %186 = vmatpush1.bf16.msra.mxu0 %v149
    %187 = vmatprep.subr.bf16.mxu0 0
    %188 = vmatpush1.bf16.msra.mxu0 %v150
    %189 = vmatprep.subr.bf16.mxu0 0
    %190 = vmatpush1.bf16.msra.mxu0 %v151
    %191 = vmatprep.subr.bf16.mxu0 0
    %192 = vmatpush1.bf16.msra.mxu0 %v152
    %193 = vmatprep.subr.bf16.mxu0 0
    %194 = vmatpush1.bf16.msra.mxu0 %v153
    %195 = vmatprep.subr.bf16.mxu0 0
    %196 = vmatpush1.bf16.msra.mxu0 %v154
    %197 = vmatprep.subr.bf16.mxu0 0
    %198 = vmatpush1.bf16.msra.mxu0 %v155
    %199 = vmatprep.subr.bf16.mxu0 0
    %200 = vmatpush1.bf16.msra.mxu0 %v156
    %201 = vmatprep.subr.bf16.mxu0 0
    %202 = vmatpush1.bf16.msra.mxu0 %v157
    %203 = vmatprep.subr.bf16.mxu0 0
    %204 = vmatpush1.bf16.msra.mxu0 %v158
    %205 = vmatprep.subr.bf16.mxu0 0
    %206 = vmatpush1.bf16.msra.mxu0 %v159
    %207 = vmatprep.subr.bf16.mxu0 0
    %208 = vmatpush1.bf16.msra.mxu0 %v160
    %209 = vmatprep.mubr.f32.mxu0 %v47
    %210 = vmatmul.mubr.f32.gmra.mrb[0].mxu0 %v46
    %v211 = vpop.f32.mrb[0].mxu0
    %v212 = vadd.f32 0.0, %v211
    %v213 = vpop.f32.mrb[0].mxu0
    %214 = vdwg.mxu0
    %v215 = vadd.f32 %v48, %v212
    %216 = vst [vmem:[#allocation8] sm:$0xff] %v215
    %v217 = vld [vmem:[#allocation2] sm:$0xff]
    %v218 = vadd.f32 %v46, %v47
    %219 = vadd.xlane.f32.xlu0 %v218
    %v220 = vpop.xlane.xlu0 %219
    %v221 = vadd.f32 %v217, %v220
    %vm222 = vcmask 7168
    %223 = vst.msk [vmem:[#allocation2] sm:$0xff] %vm222, %v221
    // Predicated region
    $region22: #{tpu_custom_call.1} parent=1 // pred_check
      %p224 = pneg %p39
    $region23: #{tpu_custom_call.1} parent=1 // pred_check_branch
      %226 = sbr.rel (%p224) target = $region25
    $region24: #{tpu_custom_call.1} parent=1 // pred_region
      %v227 = vld [vmem:[#allocation2] sm:$0xff]
      %vm228 = vcmp.gt.f32.partialorder %v227, 0.0
      %v229 = vrcp.pop %v227
      %v230 = vsel %vm228, %v229, 0.0
      %v231 = vld [vmem:[#allocation8] sm:$0xff]
      %233 = vset.pattern.permute.xlu0 0
      %234 = vperm.xlu0 %233, %v230
      %v235 = vpop.permute.xlu0 %234
      %v237 = vmul.f32 %v231, %v235
      %238 = vst [vmem:[#allocation8] sm:$0xff] %v237
    $region25: #{tpu_custom_call.1} parent=1 // pred_fallthru
      _
    // Predicated region
    $region26: #{tpu_custom_call.1} parent=1 // pred_check
      _
    $region27: #{tpu_custom_call.1} parent=1 // pred_check_branch
      %240 = sbr.rel (0) target = $region29
    $region28: #{tpu_custom_call.1} parent=1 // pred_region
      %s242 = ssub.s32 128, 128
      %243 = vsyncadd [#allocation5], %s242
      %s245 = sshll.u32 [#allocation8], 4
      %s246 = int_to_ptr.vmem [resolvable:$true] %s245
      %248 = dma.vmem_to_hbm [thread:$0]  %s246, 128, %s2, [#allocation5]
    $region29: #{tpu_custom_call.1} parent=1 // pred_fallthru
      _
    // Predicated region
    $region30: #{tpu_custom_call.1} parent=1 // pred_check
      _
    $region31: #{tpu_custom_call.1} parent=1 // pred_check_branch
      %250 = sbr.rel (0) target = $region33
    $region32: #{tpu_custom_call.1} parent=1 // pred_region
      %251 = dma.done [#allocation5], 128
    $region33: #{tpu_custom_call.1} parent=1 // pred_fallthru
      _
    %252 = vsyncpa [#allocation4], 1
    %253 = vsyncpa [#allocation7], 1
    %254 = vsyncpa [#allocation5], 1

</llo_original>
